<compile_context>
chip_gen: v6e
topology: v6e:2x2x1
jax: 0.10.0
libtpu: 0.0.40
codegen_flags: <defaults>
</compile_context>

<pallas_src>
import functools

import jax
import jax.numpy as jnp
from jax.experimental import pallas as pl
from jax.experimental.pallas import tpu as pltpu


# ----------------------------- configuration -------------------------------
HIDDEN_STATE_SIZE = 256          # model_config.HIDDEN_STATE_SIZE
LAYER_HIDDEN_SIZE = 128          # model_config.LAYER_HIDDEN_SIZE
N_HEAD_HIDDEN_LAYERS = 2         # model_config.N_HEAD_HIDDEN_LAYERS

TEAM_TIERS_VECTOR = [7, 7, 7, 7, 7, 7]          # comp   -> total 42
CHAMPION_LIST_DIM = [60, 60, 60, 60]            # champ  -> total 240
SHOP_SIZES = [63, 63, 63, 63, 63]               # shop   -> total 315
ITEM_SIZES = [60 for _ in range(10)]            # item   -> total 600
SCALAR_SIZES = [100 for _ in range(3)]          # scalar -> total 300

HEAD_SPECS = [
    ("comp", TEAM_TIERS_VECTOR),
    ("champ", CHAMPION_LIST_DIM),
    ("shop", SHOP_SIZES),
    ("item", ITEM_SIZES),
    ("scalar", SCALAR_SIZES),
]
N_HEADS = len(HEAD_SPECS)


def _round_up(x, m):
    return (x + m - 1) // m * m


# All heads are padded to one common lane-dense output width (multiple of 128).
OUT_PAD = _round_up(max(sum(sizes) for _, sizes in HEAD_SPECS), 128)   # 640

BATCH = 8


# ------------------------------ Pallas kernel ------------------------------
def _prednet_kernel(n_trunk, *refs):
    """One grid step == one prediction head (trunk MLP + fused output Linears).

    refs layout (all VMEM blocks, head axis squeezed out by BlockSpec):
      x_ref [B, H] bf16,
      (w_trunk_0 [in,out] bf16, b_trunk_0 [1,out] f32), ... ,
      w_head [L, OUT_PAD] bf16, b_head [1, OUT_PAD] f32,
      out_ref [B, OUT_PAD] f32
    """
    x_ref = refs[0]
    out_ref = refs[-1]

    h = x_ref[...]                                  # bf16 activations
    idx = 1
    for _ in range(n_trunk):
        w = refs[idx][...]
        b = refs[idx + 1][...]
        idx += 2
        acc = jnp.dot(h, w, preferred_element_type=jnp.float32) + b
        h = jnp.maximum(acc, 0.0).astype(jnp.bfloat16)     # ReLU trunk

    w_head = refs[idx][...]
    b_head = refs[idx + 1][...]
    y = jnp.dot(h, w_head, preferred_element_type=jnp.float32) + b_head
    out_ref[...] = y                                # lane-dense f32 store


def prednet_forward(x, trunk, head_w, head_b):
    """Single fused pallas_call over all heads; returns [N_HEADS, B, OUT_PAD]."""
    n_trunk = len(trunk)
    b, d_in = x.shape
    n_heads, layer_dim, out_pad = head_w.shape

    flat_inputs = [x.astype(jnp.bfloat16)]
    in_specs = [pl.BlockSpec((b, d_in), lambda h: (0, 0))]
    flops = 0
    for (w, bias) in trunk:
        flat_inputs += [w, bias]
        in_specs += [
            pl.BlockSpec((None, w.shape[1], w.shape[2]), lambda h: (h, 0, 0)),
            pl.BlockSpec((None, 1, bias.shape[2]), lambda h: (h, 0, 0)),
        ]
        flops += 2 * b * w.shape[1] * w.shape[2] * n_heads
    flat_inputs += [head_w, head_b]
    in_specs += [
        pl.BlockSpec((None, layer_dim, out_pad), lambda h: (h, 0, 0)),
        pl.BlockSpec((None, 1, out_pad), lambda h: (h, 0, 0)),
    ]
    flops += 2 * b * layer_dim * out_pad * n_heads

    out_bytes = n_heads * b * out_pad * 4
    bytes_accessed = out_bytes + sum(
        int(a.size) * a.dtype.itemsize for a in flat_inputs)

    kernel = functools.partial(_prednet_kernel, n_trunk)
    return pl.pallas_call(
        kernel,
        grid=(n_heads,),
        out_shape=jax.ShapeDtypeStruct((n_heads, b, out_pad), jnp.float32),
        in_specs=in_specs,
        out_specs=pl.BlockSpec((None, b, out_pad), lambda h: (h, 0, 0)),
        compiler_params=pltpu.CompilerParams(
            dimension_semantics=("parallel",)),
        cost_estimate=pl.CostEstimate(
            flops=int(flops), transcendentals=0,
            bytes_accessed=int(bytes_accessed)),
    )(*flat_inputs)


# --------------------------- parameter creation -----------------------------
def _linear_init(key, fan_in, fan_out):
    # Deterministic, PyTorch-Linear-like uniform init U(-1/sqrt(fan_in), +).
    kw, kb = jax.random.split(key)
    bound = 1.0 / jnp.sqrt(jnp.float32(fan_in))
    w = jax.random.uniform(kw, (fan_in, fan_out), jnp.float32, -bound, bound)
    b = jax.random.uniform(kb, (1, fan_out), jnp.float32, -bound, bound)
    return w, b


# ------------------------------- PredNetwork --------------------------------
class PredNetworkPallas:
    def __init__(self, key):
        hidden = [LAYER_HIDDEN_SIZE] * N_HEAD_HIDDEN_LAYERS
        head_keys = jax.random.split(key, N_HEADS)

        trunk_ws = [[] for _ in hidden]
        trunk_bs = [[] for _ in hidden]
        head_ws, head_bs = [], []
        for hk, (_, out_sizes) in zip(head_keys, HEAD_SPECS):
            keys = jax.random.split(hk, len(hidden) + len(out_sizes))
            prev = HIDDEN_STATE_SIZE
            for i, hsz in enumerate(hidden):
                w, bias = _linear_init(keys[i], prev, hsz)
                trunk_ws[i].append(w)
                trunk_bs[i].append(bias)
                prev = hsz
            ws, bs = [], []
            for j, o in enumerate(out_sizes):
                w, bias = _linear_init(keys[len(hidden) + j], prev, o)
                ws.append(w)
                bs.append(bias)
            w_cat = jnp.concatenate(ws, axis=1)            # [L, total]
            b_cat = jnp.concatenate(bs, axis=1)            # [1, total]
            pad = OUT_PAD - w_cat.shape[1]
            head_ws.append(jnp.pad(w_cat, ((0, 0), (0, pad))))
            head_bs.append(jnp.pad(b_cat, ((0, 0), (0, pad))))

        # stacked params: head axis leading
        self.trunk_f32 = [(jnp.stack(ws), jnp.stack(bs))
                          for ws, bs in zip(trunk_ws, trunk_bs)]
        self.trunk = [(w.astype(jnp.bfloat16), b) for (w, b) in self.trunk_f32]
        self.head_w_f32 = jnp.stack(head_ws)               # [5, L, OUT_PAD]
        self.head_w = self.head_w_f32.astype(jnp.bfloat16)
        self.head_b = jnp.stack(head_bs)                   # [5, 1, OUT_PAD] f32

    def __call__(self, hidden_state):
        out = prednet_forward(hidden_state, self.trunk, self.head_w, self.head_b)
        results = []
        for i, (_, sizes) in enumerate(HEAD_SPECS):
            total = int(sum(sizes))
            y = out[i, :, :total]
            heads, off = [], 0
            for s in sizes:
                heads.append(y[:, off:off + s])
                off += s
            results.append(heads)
        # (comp, champ, shop, item, scalar) — each a list of per-sub-head logits
        return tuple(results)


# ----------------------------- pure-JAX references ---------------------------
def _ref_head(x, net, head_idx, sizes, use_bf16):
    """Reference MultiMlp forward for one head (bf16-matched or full f32)."""
    if use_bf16:
        h = x.astype(jnp.bfloat16)
        trunk = net.trunk
        hw = net.head_w
    else:
        h = x
        trunk = net.trunk_f32
        hw = net.head_w_f32
    hb = net.head_b
    for (w, b) in trunk:
        acc = jnp.dot(h, w[head_idx], preferred_element_type=jnp.float32)
        acc = acc + b[head_idx]
        h = jnp.maximum(acc, 0.0)
        if use_bf16:
            h = h.astype(jnp.bfloat16)
    y = jnp.dot(h, hw[head_idx], preferred_element_type=jnp.float32)
    y = y + hb[head_idx]
    y = y[:, :int(sum(sizes))]
    outs, off = [], 0
    for s in sizes:
        outs.append(y[:, off:off + s])
        off += s
    return outs


if __name__ == "__main__":
    key = jax.random.PRNGKey(0)
    k_param, k_x = jax.random.split(key)

    net = PredNetworkPallas(k_param)
    hidden_state = jax.random.normal(
        k_x, (BATCH, HIDDEN_STATE_SIZE), jnp.float32)

    outs = net(hidden_state)
    jax.block_until_ready(outs)

    # correctness: tight check against bf16-matched reference, loose sanity
    # check against a full-f32 reference of the original module semantics.
    for i, (name, sizes) in enumerate(HEAD_SPECS):
        want_bf = _ref_head(hidden_state, net, i, sizes, use_bf16=True)
        want_f32 = _ref_head(hidden_state, net, i, sizes, use_bf16=False)
        got = outs[i]
        assert len(got) == len(sizes), name
        for w_bf, w_f32, g in zip(want_bf, want_f32, got):
            assert g.shape == w_bf.shape, name
            assert jnp.max(jnp.abs(w_bf - g)) < 1e-2, name
            assert jnp.max(jnp.abs(w_f32 - g)) < 5e-2, name

    print("KERNEL_OK")
</pallas_src>

<mosaic_0001>
module attributes {stable_mosaic.version = 11 : i64} {
  func.func @_prednet_kernel(%arg0: i32, %arg1: memref<8x256xbf16, #tpu.memory_space<vmem>>, %arg2: memref<1x256x128xbf16, #tpu.memory_space<vmem>>, %arg3: memref<1x1x128xf32, #tpu.memory_space<vmem>>, %arg4: memref<1x128x128xbf16, #tpu.memory_space<vmem>>, %arg5: memref<1x1x128xf32, #tpu.memory_space<vmem>>, %arg6: memref<1x128x640xbf16, #tpu.memory_space<vmem>>, %arg7: memref<1x1x640xf32, #tpu.memory_space<vmem>>, %arg8: memref<1x8x640xf32, #tpu.memory_space<vmem>>) attributes {dimension_semantics = [#tpu.dimension_semantics<parallel>], iteration_bounds = array<i64: 5>, scalar_prefetch = 0 : i64, scratch_operands = 0 : i64, tpu.core_type = #tpu.core_type<tc>, window_params = [{pipeline_mode = #tpu.pipeline_mode<synchronous>, transform_indices = @transform_0, window_bounds = array<i64: 8, 256>}, {transform_indices = @transform_1, window_bounds = array<i64: 1, 256, 128>}, {transform_indices = @transform_2, window_bounds = array<i64: 1, 1, 128>}, {transform_indices = @transform_3, window_bounds = array<i64: 1, 128, 128>}, {transform_indices = @transform_4, window_bounds = array<i64: 1, 1, 128>}, {transform_indices = @transform_5, window_bounds = array<i64: 1, 128, 640>}, {transform_indices = @transform_6, window_bounds = array<i64: 1, 1, 640>}, {transform_indices = @transform_7, window_bounds = array<i64: 1, 8, 640>}]} {
    %c0 = arith.constant 0 : index
    %c0_0 = arith.constant 0 : index
    %0 = vector.load %arg1[%c0, %c0_0] : memref<8x256xbf16, #tpu.memory_space<vmem>>, vector<8x256xbf16>
    %c0_1 = arith.constant 0 : index
    %c0_2 = arith.constant 0 : index
    %c0_3 = arith.constant 0 : index
    %1 = vector.load %arg2[%c0_1, %c0_2, %c0_3] : memref<1x256x128xbf16, #tpu.memory_space<vmem>>, vector<1x256x128xbf16>
    %2 = vector.shape_cast %1 : vector<1x256x128xbf16> to vector<256x128xbf16>
    %c0_4 = arith.constant 0 : index
    %c0_5 = arith.constant 0 : index
    %c0_6 = arith.constant 0 : index
    %3 = vector.load %arg3[%c0_4, %c0_5, %c0_6] : memref<1x1x128xf32, #tpu.memory_space<vmem>>, vector<1x1x128xf32>
    %4 = vector.shape_cast %3 : vector<1x1x128xf32> to vector<1x128xf32>
    %cst = arith.constant dense<0.000000e+00> : vector<8x128xf32>
    %5 = tpu.matmul %0, %2, %cst {dimension_numbers = #tpu.dot_dimension_numbers<[1], [0], [0], [1], [0, 0, 1, 1], [], []>} : vector<8x256xbf16>, vector<256x128xbf16>, vector<8x128xf32> -> vector<8x128xf32>
    %6 = vector.broadcast %4 : vector<1x128xf32> to vector<8x128xf32>
    %7 = arith.addf %5, %6 : vector<8x128xf32>
    %cst_7 = arith.constant 0.000000e+00 : f32
    %8 = vector.broadcast %cst_7 : f32 to vector<8x128xf32>
    %9 = arith.maximumf %7, %8 : vector<8x128xf32>
    %10 = arith.truncf %9 : vector<8x128xf32> to vector<8x128xbf16>
    %c0_8 = arith.constant 0 : index
    %c0_9 = arith.constant 0 : index
    %c0_10 = arith.constant 0 : index
    %11 = vector.load %arg4[%c0_8, %c0_9, %c0_10] : memref<1x128x128xbf16, #tpu.memory_space<vmem>>, vector<1x128x128xbf16>
    %12 = vector.shape_cast %11 : vector<1x128x128xbf16> to vector<128x128xbf16>
    %c0_11 = arith.constant 0 : index
    %c0_12 = arith.constant 0 : index
    %c0_13 = arith.constant 0 : index
    %13 = vector.load %arg5[%c0_11, %c0_12, %c0_13] : memref<1x1x128xf32, #tpu.memory_space<vmem>>, vector<1x1x128xf32>
    %14 = vector.shape_cast %13 : vector<1x1x128xf32> to vector<1x128xf32>
    %cst_14 = arith.constant dense<0.000000e+00> : vector<8x128xf32>
    %15 = tpu.matmul %10, %12, %cst_14 {dimension_numbers = #tpu.dot_dimension_numbers<[1], [0], [0], [1], [0, 0, 1, 1], [], []>} : vector<8x128xbf16>, vector<128x128xbf16>, vector<8x128xf32> -> vector<8x128xf32>
    %16 = vector.broadcast %14 : vector<1x128xf32> to vector<8x128xf32>
    %17 = arith.addf %15, %16 : vector<8x128xf32>
    %cst_15 = arith.constant 0.000000e+00 : f32
    %18 = vector.broadcast %cst_15 : f32 to vector<8x128xf32>
    %19 = arith.maximumf %17, %18 : vector<8x128xf32>
    %20 = arith.truncf %19 : vector<8x128xf32> to vector<8x128xbf16>
    %c0_16 = arith.constant 0 : index
    %c0_17 = arith.constant 0 : index
    %c0_18 = arith.constant 0 : index
    %21 = vector.load %arg6[%c0_16, %c0_17, %c0_18] : memref<1x128x640xbf16, #tpu.memory_space<vmem>>, vector<1x128x640xbf16>
    %22 = vector.shape_cast %21 : vector<1x128x640xbf16> to vector<128x640xbf16>
    %c0_19 = arith.constant 0 : index
    %c0_20 = arith.constant 0 : index
    %c0_21 = arith.constant 0 : index
    %23 = vector.load %arg7[%c0_19, %c0_20, %c0_21] : memref<1x1x640xf32, #tpu.memory_space<vmem>>, vector<1x1x640xf32>
    %24 = vector.shape_cast %23 : vector<1x1x640xf32> to vector<1x640xf32>
    %cst_22 = arith.constant dense<0.000000e+00> : vector<8x640xf32>
    %25 = tpu.matmul %20, %22, %cst_22 {dimension_numbers = #tpu.dot_dimension_numbers<[1], [0], [0], [1], [0, 0, 1, 1], [], []>} : vector<8x128xbf16>, vector<128x640xbf16>, vector<8x640xf32> -> vector<8x640xf32>
    %26 = vector.broadcast %24 : vector<1x640xf32> to vector<8x640xf32>
    %27 = arith.addf %25, %26 : vector<8x640xf32>
    %c0_23 = arith.constant 0 : index
    %c0_24 = arith.constant 0 : index
    %c0_25 = arith.constant 0 : index
    %28 = vector.load %arg8[%c0_23, %c0_24, %c0_25] : memref<1x8x640xf32, #tpu.memory_space<vmem>>, vector<1x8x640xf32>
    %29 = vector.shape_cast %28 : vector<1x8x640xf32> to vector<8x640xf32>
    %30 = vector.shape_cast %27 : vector<8x640xf32> to vector<1x8x640xf32>
    tpu.vector_store %arg8[%c0_23, %c0_24, %c0_25], %30 {strides = array<i32>} : memref<1x8x640xf32, #tpu.memory_space<vmem>>, vector<1x8x640xf32>,
    return
  }
  func.func @transform_0(%arg0: i32) -> (i32, i32) {
    %c0_i32 = arith.constant 0 : i32
    %c0_i32_0 = arith.constant 0 : i32
    %c0_i32_1 = arith.constant 0 : i32
    return %c0_i32, %c0_i32_0 : i32, i32
  }
  func.func @transform_1(%arg0: i32) -> (i32, i32, i32) {
    %c0_i32 = arith.constant 0 : i32
    %c0_i32_0 = arith.constant 0 : i32
    %c0_i32_1 = arith.constant 0 : i32
    return %arg0, %c0_i32, %c0_i32_0 : i32, i32, i32
  }
  func.func @transform_2(%arg0: i32) -> (i32, i32, i32) {
    %c0_i32 = arith.constant 0 : i32
    %c0_i32_0 = arith.constant 0 : i32
    %c0_i32_1 = arith.constant 0 : i32
    return %arg0, %c0_i32, %c0_i32_0 : i32, i32, i32
  }
  func.func @transform_3(%arg0: i32) -> (i32, i32, i32) {
    %c0_i32 = arith.constant 0 : i32
    %c0_i32_0 = arith.constant 0 : i32
    %c0_i32_1 = arith.constant 0 : i32
    return %arg0, %c0_i32, %c0_i32_0 : i32, i32, i32
  }
  func.func @transform_4(%arg0: i32) -> (i32, i32, i32) {
    %c0_i32 = arith.constant 0 : i32
    %c0_i32_0 = arith.constant 0 : i32
    %c0_i32_1 = arith.constant 0 : i32
    return %arg0, %c0_i32, %c0_i32_0 : i32, i32, i32
  }
  func.func @transform_5(%arg0: i32) -> (i32, i32, i32) {
    %c0_i32 = arith.constant 0 : i32
    %c0_i32_0 = arith.constant 0 : i32
    %c0_i32_1 = arith.constant 0 : i32
    return %arg0, %c0_i32, %c0_i32_0 : i32, i32, i32
  }
  func.func @transform_6(%arg0: i32) -> (i32, i32, i32) {
    %c0_i32 = arith.constant 0 : i32
    %c0_i32_0 = arith.constant 0 : i32
    %c0_i32_1 = arith.constant 0 : i32
    return %arg0, %c0_i32, %c0_i32_0 : i32, i32, i32
  }
  func.func @transform_7(%arg0: i32) -> (i32, i32, i32) {
    %c0_i32 = arith.constant 0 : i32
    %c0_i32_0 = arith.constant 0 : i32
    %c0_i32_1 = arith.constant 0 : i32
    return %arg0, %c0_i32, %c0_i32_0 : i32, i32, i32
  }
}

</mosaic_0001>

<llo_original>
// kernel: tpu_custom_call.1
$region0: #{tpu_custom_call.1}
  #allocation0 [shape = 'u32[]', space=smem, size = 0x4, offset = 0x4, fixed_abs, tag = 'smem constant byte address 0x4 - core index']
  #allocation1 [shape = 'u32[144,128]{1,0:T(1,128)}', space=vmem, size = 0x12000, scoped, tag = 'internal scratch']
  %s0 = inlined_call_operand.hbm [shape: bf16[8,256], index: 0, kind: input, shape index: {}]
  %s1 = inlined_call_operand.hbm [shape: bf16[5,256,128], index: 1, kind: input, shape index: {}]
  %s2 = inlined_call_operand.hbm [shape: f32[5,1,128], index: 2, kind: input, shape index: {}]
  %s3 = inlined_call_operand.hbm [shape: bf16[5,128,128], index: 3, kind: input, shape index: {}]
  %s4 = inlined_call_operand.vmem [shape: f32[5,1,128], index: 4, kind: input, shape index: {}]
  %s5 = inlined_call_operand.hbm [shape: bf16[5,128,640], index: 5, kind: input, shape index: {}]
  %s6 = inlined_call_operand.hbm [shape: f32[5,1,640], index: 6, kind: input, shape index: {}]
  %s7 = inlined_call_operand.hbm [shape: f32[5,8,640], index: 7, kind: output, shape index: {}]
  %s8 = sld [smem:[#allocation0]]
  $region85: #{tpu_custom_call.1} parent=0
    _
  %s10 = ssub.s32 1, %s8
  %s11 = scalar_select 0, %s10, %s8
  $region1: #{tpu_custom_call.1} parent=0
    #allocation2 [shape = 'u8[4096]{0}', space=vmem, size = 0x1000, scoped, tag = 'input window, operand 0, single buffered']
    #allocation3 [shape = 's32[2]{0}', space=sflag, size = 0x8, scoped, tag = 'scoped memory for tpu_custom_call.1']
    #allocation4 [shape = 's32[2]{0}', space=sflag, size = 0x8, scoped, tag = 'scoped memory for tpu_custom_call.1']
    #allocation5 [shape = 'u8[131072]{0}', space=vmem, size = 0x20000, scoped, tag = 'input window, operand 1']
    #allocation6 [shape = 's32[2]{0}', space=sflag, size = 0x8, scoped, tag = 'scoped memory for tpu_custom_call.1']
    #allocation7 [shape = 'u8[1024]{0}', space=vmem, size = 0x400, scoped, tag = 'input window, operand 2']
    #allocation8 [shape = 'u8[65536]{0}', space=vmem, size = 0x10000, scoped, tag = 'input window, operand 3']
    #allocation9 [shape = 's32[2]{0}', space=sflag, size = 0x8, scoped, tag = 'scoped memory for tpu_custom_call.1']
    #allocation10 [shape = 'u8[327680]{0}', space=vmem, size = 0x50000, scoped, tag = 'input window, operand 5']
    #allocation11 [shape = 'u8[5120]{0}', space=vmem, size = 0x1400, scoped, tag = 'input window, operand 6']
    #allocation12 [shape = 's32[2]{0}', space=sflag, size = 0x8, scoped, tag = 'scoped memory for tpu_custom_call.1']
    #allocation13 [shape = 'u8[40960]{0}', space=vmem, size = 0xa000, scoped, tag = 'output window, operand 0']
    %12 = vsyncpa [#allocation3], 0
    %13 = vsyncpa [#allocation6], 0
    %s14 = scalar_lea.sflag [#allocation6], 1
    %15 = vsyncpa %s14, 0
    %16 = vsyncpa [#allocation9], 0
    %s17 = scalar_lea.sflag [#allocation9], 1
    %18 = vsyncpa %s17, 0
    %19 = vsyncpa [#allocation12], 0
    %s20 = scalar_lea.sflag [#allocation12], 1
    %21 = vsyncpa %s20, 0
    %22 = vsyncpa [#allocation4], 0
    %s23 = scalar_lea.sflag [#allocation4], 1
    %24 = vsyncpa %s23, 0
    loop: start=0, step=1, limit=7
    $region2: #{tpu_custom_call.1} parent=1 // loop_pre_header
      _
    $region3: #{tpu_custom_call.1} parent=1 // loop_header
      %s26 = sphi 0, %s30
      %p27 = scmp.ge.s32.totalorder %s26, 7
      %s34 = sphi 0, %s34
      %s36 = sphi 0, %s34
      %s37 = sphi 0, %s36
      %s51 = sphi 0, %s37
      %s57 = sphi 0, %s59
      %s60 = sphi 0, %s57
      %s61 = sphi 0, %s60
      %s77 = sphi 0, %s61
      %s83 = sphi 0, %s85
      %s86 = sphi 0, %s83
      %s87 = sphi 0, %s86
      %s103 = sphi 0, %s87
      %s109 = sphi 0, %s111
      %s112 = sphi 0, %s109
      %s113 = sphi 0, %s112
      %s129 = sphi 0, %s113
      %s135 = sphi 0, %s137
      %s138 = sphi 0, %s135
      %s139 = sphi 0, %s138
      %s155 = sphi 0, %s139
      %s161 = sphi 0, %s163
      %s164 = sphi 0, %s161
      %s165 = sphi 0, %s164
      %s181 = sphi 0, %s165
      %s187 = sphi 0, %s189
      %s190 = sphi 0, %s187
      %s191 = sphi 0, %s190
      %s207 = sphi 0, %s191
      %s213 = sphi 0, %s215
      %s216 = sphi 0, %s213
      %s217 = sphi 0, %s216
      %s233 = sphi 0, %s217
    $region4: #{tpu_custom_call.1} parent=1 // loop_header_branch
      %29 = sbr.rel (%p27) target = $region8
    $region5: #{tpu_custom_call.1} parent=1 // loop_body
      %s31 = ssub.s32 %s26, 1
      %s32 = ssub.s32 %s26, 2
      %s33 = sadd.s32 %s26, 1
      %s35 = sadd.s32 %s34, 1
      %p38 = scmp.eq.s32.totalorder %s26, 4
      %p39 = scmp.ne.s32.totalorder %s34, %s36
      %p40 = scmp.eq.s32.totalorder %s26, 0
      %p41 = por %p39, %p40
      %p42 = scmp.ne.s32.totalorder %s34, %s36
      %p43 = scmp.eq.s32.totalorder %s31, 4
      %p44 = por %p42, %p43
      %p45 = scmp.ne.s32.totalorder %s36, %s37
      %p46 = scmp.eq.s32.totalorder %s31, 0
      %p47 = por %p45, %p46
      %p48 = scmp.ne.s32.totalorder %s36, %s37
      %p49 = scmp.eq.s32.totalorder %s32, 4
      %p50 = por %p48, %p49
      %p52 = scmp.ne.s32.totalorder %s37, %s51
      %p53 = scmp.eq.s32.totalorder %s32, 0
      %p54 = por %p52, %p53
      %s55 = ssub.s32 %s26, %s33
      %p56 = scmp.eq.s32.totalorder %s55, 0
      %s58 = sadd.s32 %s57, 1
      %s59 = scalar_select %p56, %s57, %s58
      %p62 = pneg %p56
      %p63 = scmp.eq.s32.totalorder %s26, 4
      %p64 = por %p62, %p63
      %p65 = scmp.ne.s32.totalorder %s57, %s60
      %p66 = scmp.eq.s32.totalorder %s26, 0
      %p67 = por %p65, %p66
      %p68 = scmp.ne.s32.totalorder %s57, %s60
      %p69 = scmp.eq.s32.totalorder %s31, 4
      %p70 = por %p68, %p69
      %p71 = scmp.ne.s32.totalorder %s60, %s61
      %p72 = scmp.eq.s32.totalorder %s31, 0
      %p73 = por %p71, %p72
      %p74 = scmp.ne.s32.totalorder %s60, %s61
      %p75 = scmp.eq.s32.totalorder %s32, 4
      %p76 = por %p74, %p75
      %p78 = scmp.ne.s32.totalorder %s61, %s77
      %p79 = scmp.eq.s32.totalorder %s32, 0
      %p80 = por %p78, %p79
      %s81 = ssub.s32 %s26, %s33
      %p82 = scmp.eq.s32.totalorder %s81, 0
      %s84 = sadd.s32 %s83, 1
      %s85 = scalar_select %p82, %s83, %s84
      %p88 = pneg %p82
      %p89 = scmp.eq.s32.totalorder %s26, 4
      %p90 = por %p88, %p89
      %p91 = scmp.ne.s32.totalorder %s83, %s86
      %p92 = scmp.eq.s32.totalorder %s26, 0
      %p93 = por %p91, %p92
      %p94 = scmp.ne.s32.totalorder %s83, %s86
      %p95 = scmp.eq.s32.totalorder %s31, 4
      %p96 = por %p94, %p95
      %p97 = scmp.ne.s32.totalorder %s86, %s87
      %p98 = scmp.eq.s32.totalorder %s31, 0
      %p99 = por %p97, %p98
      %p100 = scmp.ne.s32.totalorder %s86, %s87
      %p101 = scmp.eq.s32.totalorder %s32, 4
      %p102 = por %p100, %p101
      %p104 = scmp.ne.s32.totalorder %s87, %s103
      %p105 = scmp.eq.s32.totalorder %s32, 0
      %p106 = por %p104, %p105
      %s107 = ssub.s32 %s26, %s33
      %p108 = scmp.eq.s32.totalorder %s107, 0
      %s110 = sadd.s32 %s109, 1
      %s111 = scalar_select %p108, %s109, %s110
      %p114 = pneg %p108
      %p115 = scmp.eq.s32.totalorder %s26, 4
      %p116 = por %p114, %p115
      %p117 = scmp.ne.s32.totalorder %s109, %s112
      %p118 = scmp.eq.s32.totalorder %s26, 0
      %p119 = por %p117, %p118
      %p120 = scmp.ne.s32.totalorder %s109, %s112
      %p121 = scmp.eq.s32.totalorder %s31, 4
      %p122 = por %p120, %p121
      %p123 = scmp.ne.s32.totalorder %s112, %s113
      %p124 = scmp.eq.s32.totalorder %s31, 0
      %p125 = por %p123, %p124
      %p126 = scmp.ne.s32.totalorder %s112, %s113
      %p127 = scmp.eq.s32.totalorder %s32, 4
      %p128 = por %p126, %p127
      %p130 = scmp.ne.s32.totalorder %s113, %s129
      %p131 = scmp.eq.s32.totalorder %s32, 0
      %p132 = por %p130, %p131
      %s133 = ssub.s32 %s26, %s33
      %p134 = scmp.eq.s32.totalorder %s133, 0
      %s136 = sadd.s32 %s135, 1
      %s137 = scalar_select %p134, %s135, %s136
      %p140 = pneg %p134
      %p141 = scmp.eq.s32.totalorder %s26, 4
      %p142 = por %p140, %p141
      %p143 = scmp.ne.s32.totalorder %s135, %s138
      %p144 = scmp.eq.s32.totalorder %s26, 0
      %p145 = por %p143, %p144
      %p146 = scmp.ne.s32.totalorder %s135, %s138
      %p147 = scmp.eq.s32.totalorder %s31, 4
      %p148 = por %p146, %p147
      %p149 = scmp.ne.s32.totalorder %s138, %s139
      %p150 = scmp.eq.s32.totalorder %s31, 0
      %p151 = por %p149, %p150
      %p152 = scmp.ne.s32.totalorder %s138, %s139
      %p153 = scmp.eq.s32.totalorder %s32, 4
      %p154 = por %p152, %p153
      %p156 = scmp.ne.s32.totalorder %s139, %s155
      %p157 = scmp.eq.s32.totalorder %s32, 0
      %p158 = por %p156, %p157
      %s159 = ssub.s32 %s26, %s33
      %p160 = scmp.eq.s32.totalorder %s159, 0
      %s162 = sadd.s32 %s161, 1
      %s163 = scalar_select %p160, %s161, %s162
      %p166 = pneg %p160
      %p167 = scmp.eq.s32.totalorder %s26, 4
      %p168 = por %p166, %p167
      %p169 = scmp.ne.s32.totalorder %s161, %s164
      %p170 = scmp.eq.s32.totalorder %s26, 0
      %p171 = por %p169, %p170
      %p172 = scmp.ne.s32.totalorder %s161, %s164
      %p173 = scmp.eq.s32.totalorder %s31, 4
      %p174 = por %p172, %p173
      %p175 = scmp.ne.s32.totalorder %s164, %s165
      %p176 = scmp.eq.s32.totalorder %s31, 0
      %p177 = por %p175, %p176
      %p178 = scmp.ne.s32.totalorder %s164, %s165
      %p179 = scmp.eq.s32.totalorder %s32, 4
      %p180 = por %p178, %p179
      %p182 = scmp.ne.s32.totalorder %s165, %s181
      %p183 = scmp.eq.s32.totalorder %s32, 0
      %p184 = por %p182, %p183
      %s185 = ssub.s32 %s26, %s33
      %p186 = scmp.eq.s32.totalorder %s185, 0
      %s188 = sadd.s32 %s187, 1
      %s189 = scalar_select %p186, %s187, %s188
      %p192 = pneg %p186
      %p193 = scmp.eq.s32.totalorder %s26, 4
      %p194 = por %p192, %p193
      %p195 = scmp.ne.s32.totalorder %s187, %s190
      %p196 = scmp.eq.s32.totalorder %s26, 0
      %p197 = por %p195, %p196
      %p198 = scmp.ne.s32.totalorder %s187, %s190
      %p199 = scmp.eq.s32.totalorder %s31, 4
      %p200 = por %p198, %p199
      %p201 = scmp.ne.s32.totalorder %s190, %s191
      %p202 = scmp.eq.s32.totalorder %s31, 0
      %p203 = por %p201, %p202
      %p204 = scmp.ne.s32.totalorder %s190, %s191
      %p205 = scmp.eq.s32.totalorder %s32, 4
      %p206 = por %p204, %p205
      %p208 = scmp.ne.s32.totalorder %s191, %s207
      %p209 = scmp.eq.s32.totalorder %s32, 0
      %p210 = por %p208, %p209
      %s211 = ssub.s32 %s26, %s33
      %p212 = scmp.eq.s32.totalorder %s211, 0
      %s214 = sadd.s32 %s213, 1
      %s215 = scalar_select %p212, %s213, %s214
      %p218 = pneg %p212
      %p219 = scmp.eq.s32.totalorder %s26, 4
      %p220 = por %p218, %p219
      %p221 = scmp.ne.s32.totalorder %s213, %s216
      %p222 = scmp.eq.s32.totalorder %s26, 0
      %p223 = por %p221, %p222
      %p224 = scmp.ne.s32.totalorder %s213, %s216
      %p225 = scmp.eq.s32.totalorder %s31, 4
      %p226 = por %p224, %p225
      %p227 = scmp.ne.s32.totalorder %s216, %s217
      %p228 = scmp.eq.s32.totalorder %s31, 0
      %p229 = por %p227, %p228
      %p230 = scmp.ne.s32.totalorder %s216, %s217
      %p231 = scmp.eq.s32.totalorder %s32, 4
      %p232 = por %p230, %p231
      %p234 = scmp.ne.s32.totalorder %s217, %s233
      %p235 = scmp.eq.s32.totalorder %s32, 0
      %p236 = por %p234, %p235
      %p237 = scmp.le.s32.totalorder 1, %s26
      %p238 = scmp.lt.s32.totalorder %s26, 6
      %p239 = pnand %p237, %p238
      %p240 = pneg %p239
      // Predicated region
      $region9: #{tpu_custom_call.1} parent=5 // pred_check
        _
      $region10: #{tpu_custom_call.1} parent=5 // pred_check_branch
        %242 = sbr.rel (%p239) target = $region12
      $region11: #{tpu_custom_call.1} parent=5 // pred_region
        %s243 = ssub.s32 %s26, 1
        // Predicated region
        $region13: #{tpu_custom_call.1} parent=11 // pred_check
          %p244 = pneg %p47
        $region14: #{tpu_custom_call.1} parent=11 // pred_check_branch
          %246 = sbr.rel (%p244) target = $region16
        $region15: #{tpu_custom_call.1} parent=11 // pred_region
          %s248 = ssub.s32 128, 128
          %249 = vsyncadd [#allocation3], %s248
          %s251 = sshll.u32 [#allocation2], 4
          %s252 = int_to_ptr.vmem [resolvable:$true] %s251
          %254 = dma.hbm_to_vmem [thread:$0]  %s0, 128, %s252, [#allocation3]
        $region16: #{tpu_custom_call.1} parent=11 // pred_fallthru
          _
      $region12: #{tpu_custom_call.1} parent=5 // pred_fallthru
        _
      %p255 = scmp.lt.s32.totalorder %s26, 5
      // Predicated region
      $region17: #{tpu_custom_call.1} parent=5 // pred_check
        %p256 = pneg %p255
      $region18: #{tpu_custom_call.1} parent=5 // pred_check_branch
        %258 = sbr.rel (%p256) target = $region20
      $region19: #{tpu_custom_call.1} parent=5 // pred_region
        // Predicated region
        $region21: #{tpu_custom_call.1} parent=19 // pred_check
          %p259 = pneg %p67
        $region22: #{tpu_custom_call.1} parent=19 // pred_check_branch
          %261 = sbr.rel (%p259) target = $region24
        $region23: #{tpu_custom_call.1} parent=19 // pred_region
          %s262 = sand.u32 %s26, 1
          %s263 = scalar_lea.sflag [#allocation6], %s262
          %s264 = sand.u32 %s57, 1
          %s265 = smul.addr %s264, 128
          %s266 = scalar_lea.vmem [#allocation5], %s265
          %s268 = ssub.s32 2048, 2048
          %269 = vsyncadd %s263, %s268
          %s270 = smul.addr %s26, 32
          %s271 = smul.addr %s270, 64
          %s272 = scalar_lea.hbm %s1, %s271
          %s273 = sshll.u32 %s266, 4
          %s274 = int_to_ptr.vmem [resolvable:$true] %s273
          %279 = dma.hbm_to_vmem [thread:$0]  %s272, 2048, %s274, %s263, 64, 64, 4
        $region24: #{tpu_custom_call.1} parent=19 // pred_fallthru
          _
        // Predicated region
        $region25: #{tpu_custom_call.1} parent=19 // pred_check
          %p280 = pneg %p93
        $region26: #{tpu_custom_call.1} parent=19 // pred_check_branch
          %282 = sbr.rel (%p280) target = $region28
        $region27: #{tpu_custom_call.1} parent=19 // pred_region
          %s283 = sand.u32 %s26, 1
          %s284 = scalar_lea.sflag [#allocation6], %s283
          %s285 = sand.u32 %s83, 1
          %s286 = scalar_lea.vmem [#allocation7], %s285
          %s288 = ssub.s32 16, 16
          %289 = vsyncadd %s284, %s288
          %s290 = smul.addr %s26, 16
          %s291 = scalar_lea.hbm %s2, %s290
          %s293 = sshll.u32 %s286, 4
          %s294 = int_to_ptr.vmem [resolvable:$true] %s293
          %296 = dma.hbm_to_vmem [thread:$0]  %s291, 16, %s294, %s284
        $region28: #{tpu_custom_call.1} parent=19 // pred_fallthru
          _
        // Predicated region
        $region29: #{tpu_custom_call.1} parent=19 // pred_check
          %p297 = pneg %p119
        $region30: #{tpu_custom_call.1} parent=19 // pred_check_branch
          %299 = sbr.rel (%p297) target = $region32
        $region31: #{tpu_custom_call.1} parent=19 // pred_region
          %s300 = sand.u32 %s26, 1
          %s301 = scalar_lea.sflag [#allocation9], %s300
          %s302 = sand.u32 %s109, 1
          %s303 = smul.addr %s302, 64
          %s304 = scalar_lea.vmem [#allocation8], %s303
          %s306 = ssub.s32 1024, 1024
          %307 = vsyncadd %s301, %s306
          %s308 = smul.addr %s26, 16
          %s309 = smul.addr %s308, 64
          %s310 = scalar_lea.hbm %s3, %s309
          %s311 = sshll.u32 %s304, 4
          %s312 = int_to_ptr.vmem [resolvable:$true] %s311
          %317 = dma.hbm_to_vmem [thread:$0]  %s310, 1024, %s312, %s301, 64, 64, 4
        $region32: #{tpu_custom_call.1} parent=19 // pred_fallthru
          _
        // Predicated region
        $region33: #{tpu_custom_call.1} parent=19 // pred_check
          %p318 = pneg %p145
        $region34: #{tpu_custom_call.1} parent=19 // pred_check_branch
          %320 = sbr.rel (%p318) target = $region36
        $region35: #{tpu_custom_call.1} parent=19 // pred_region
          %p321 = scmp.lt.s32.totalorder %s26, 4
          %s322 = scalar_select %p321, %s26, 4
          %s323 = scalar_lea.vmem %s4, %s322
        $region36: #{tpu_custom_call.1} parent=19 // pred_fallthru
          _
        // Predicated region
        $region37: #{tpu_custom_call.1} parent=19 // pred_check
          %p324 = pneg %p171
        $region38: #{tpu_custom_call.1} parent=19 // pred_check_branch
          %326 = sbr.rel (%p324) target = $region40
        $region39: #{tpu_custom_call.1} parent=19 // pred_region
          %s327 = sand.u32 %s26, 1
          %s328 = scalar_lea.sflag [#allocation9], %s327
          %s329 = sand.u32 %s161, 1
          %s330 = smul.addr %s329, 320
          %s331 = scalar_lea.vmem [#allocation10], %s330
          %s333 = ssub.s32 5120, 5120
          %334 = vsyncadd %s328, %s333
          %s335 = smul.addr %s26, 80
          %s336 = smul.addr %s335, 64
          %s337 = scalar_lea.hbm %s5, %s336
          %s338 = sshll.u32 %s331, 4
          %s339 = int_to_ptr.vmem [resolvable:$true] %s338
          %344 = dma.hbm_to_vmem [thread:$0]  %s337, 5120, %s339, %s328, 320, 320, 20
        $region40: #{tpu_custom_call.1} parent=19 // pred_fallthru
          _
        // Predicated region
        $region41: #{tpu_custom_call.1} parent=19 // pred_check
          %p345 = pneg %p197
        $region42: #{tpu_custom_call.1} parent=19 // pred_check_branch
          %347 = sbr.rel (%p345) target = $region44
        $region43: #{tpu_custom_call.1} parent=19 // pred_region
          %s348 = sand.u32 %s187, 1
          %s349 = scalar_lea.sflag [#allocation12], %s348
          %s350 = sand.u32 %s187, 1
          %s351 = smul.addr %s350, 5
          %s352 = scalar_lea.vmem [#allocation11], %s351
          %s354 = ssub.s32 80, 80
          %355 = vsyncadd %s349, %s354
          %s356 = smul.addr %s26, 5
          %s357 = smul.addr %s356, 16
          %s358 = scalar_lea.hbm %s6, %s357
          %s360 = sshll.u32 %s352, 4
          %s361 = int_to_ptr.vmem [resolvable:$true] %s360
          %363 = dma.hbm_to_vmem [thread:$0]  %s358, 80, %s361, %s349
        $region44: #{tpu_custom_call.1} parent=19 // pred_fallthru
          _
      $region20: #{tpu_custom_call.1} parent=5 // pred_fallthru
        _
      %p364 = scmp.le.s32.totalorder 1, %s26
      %p365 = scmp.lt.s32.totalorder %s26, 6
      %p366 = pnand %p364, %p365
      %p367 = pneg %p366
      // Predicated region
      $region45: #{tpu_custom_call.1} parent=5 // pred_check
        _
      $region46: #{tpu_custom_call.1} parent=5 // pred_check_branch
        %369 = sbr.rel (%p366) target = $region48
      $region47: #{tpu_custom_call.1} parent=5 // pred_region
        %s370 = ssub.s32 %s26, 1
        // Predicated region
        $region49: #{tpu_custom_call.1} parent=47 // pred_check
          %p371 = pneg %p47
        $region50: #{tpu_custom_call.1} parent=47 // pred_check_branch
          %373 = sbr.rel (%p371) target = $region52
        $region51: #{tpu_custom_call.1} parent=47 // pred_region
          %374 = dma.done [#allocation3], 128
        $region52: #{tpu_custom_call.1} parent=47 // pred_fallthru
          _
        %s375 = sand.u32 %s31, 1
        %s376 = scalar_lea.sflag [#allocation6], %s375
        %s377 = sand.u32 %s60, 1
        %s378 = smul.addr %s377, 128
        %s379 = scalar_lea.vmem [#allocation5], %s378
        // Predicated region
        $region53: #{tpu_custom_call.1} parent=47 // pred_check
          %p380 = pneg %p73
        $region54: #{tpu_custom_call.1} parent=47 // pred_check_branch
          %382 = sbr.rel (%p380) target = $region56
        $region55: #{tpu_custom_call.1} parent=47 // pred_region
          %383 = dma.done %s376, 2048
        $region56: #{tpu_custom_call.1} parent=47 // pred_fallthru
          _
        %s384 = sand.u32 %s31, 1
        %s385 = scalar_lea.sflag [#allocation6], %s384
        %s386 = sand.u32 %s86, 1
        %s387 = scalar_lea.vmem [#allocation7], %s386
        // Predicated region
        $region57: #{tpu_custom_call.1} parent=47 // pred_check
          %p388 = pneg %p99
        $region58: #{tpu_custom_call.1} parent=47 // pred_check_branch
          %390 = sbr.rel (%p388) target = $region60
        $region59: #{tpu_custom_call.1} parent=47 // pred_region
          %391 = dma.done %s385, 16
        $region60: #{tpu_custom_call.1} parent=47 // pred_fallthru
          _
        %s392 = sand.u32 %s31, 1
        %s393 = scalar_lea.sflag [#allocation9], %s392
        %s394 = sand.u32 %s112, 1
        %s395 = smul.addr %s394, 64
        %s396 = scalar_lea.vmem [#allocation8], %s395
        // Predicated region
        $region61: #{tpu_custom_call.1} parent=47 // pred_check
          %p397 = pneg %p125
        $region62: #{tpu_custom_call.1} parent=47 // pred_check_branch
          %399 = sbr.rel (%p397) target = $region64
        $region63: #{tpu_custom_call.1} parent=47 // pred_region
          %400 = dma.done %s393, 1024
        $region64: #{tpu_custom_call.1} parent=47 // pred_fallthru
          _
        %s401 = sand.u32 %s31, 1
        %s402 = scalar_lea.sflag [#allocation9], %s401
        %s403 = sand.u32 %s164, 1
        %s404 = smul.addr %s403, 320
        %s405 = scalar_lea.vmem [#allocation10], %s404
        // Predicated region
        $region65: #{tpu_custom_call.1} parent=47 // pred_check
          %p406 = pneg %p177
        $region66: #{tpu_custom_call.1} parent=47 // pred_check_branch
          %408 = sbr.rel (%p406) target = $region68
        $region67: #{tpu_custom_call.1} parent=47 // pred_region
          %409 = dma.done %s402, 5120
        $region68: #{tpu_custom_call.1} parent=47 // pred_fallthru
          _
        %s410 = sand.u32 %s190, 1
        %s411 = scalar_lea.sflag [#allocation12], %s410
        %s412 = sand.u32 %s190, 1
        %s413 = smul.addr %s412, 5
        %s414 = scalar_lea.vmem [#allocation11], %s413
        // Predicated region
        $region69: #{tpu_custom_call.1} parent=47 // pred_check
          %p415 = pneg %p203
        $region70: #{tpu_custom_call.1} parent=47 // pred_check_branch
          %417 = sbr.rel (%p415) target = $region72
        $region71: #{tpu_custom_call.1} parent=47 // pred_region
          %418 = dma.done %s411, 80
        $region72: #{tpu_custom_call.1} parent=47 // pred_fallthru
          _
        %p419 = pneg %p47
        %p420 = pneg %p44
        %s421 = sand.u32 %s31, 1
        %s422 = scalar_lea.sflag [#allocation6], %s421
        %s423 = sand.u32 %s60, 1
        %s424 = smul.addr %s423, 128
        %s425 = scalar_lea.vmem [#allocation5], %s424
        %p426 = pneg %p73
        %p427 = pneg %p70
        %s428 = sand.u32 %s31, 1
        %s429 = scalar_lea.sflag [#allocation6], %s428
        %s430 = sand.u32 %s86, 1
        %s431 = scalar_lea.vmem [#allocation7], %s430
        %p432 = pneg %p99
        %p433 = pneg %p96
        %s434 = sand.u32 %s31, 1
        %s435 = scalar_lea.sflag [#allocation9], %s434
        %s436 = sand.u32 %s112, 1
        %s437 = smul.addr %s436, 64
        %s438 = scalar_lea.vmem [#allocation8], %s437
        %p439 = pneg %p125
        %p440 = pneg %p122
        %p441 = scmp.lt.s32.totalorder %s31, 4
        %s442 = scalar_select %p441, %s31, 4
        %s443 = scalar_lea.vmem %s4, %s442
        %p444 = pneg %p151
        %p445 = pneg %p148
        %s446 = sand.u32 %s31, 1
        %s447 = scalar_lea.sflag [#allocation9], %s446
        %s448 = sand.u32 %s164, 1
        %s449 = smul.addr %s448, 320
        %s450 = scalar_lea.vmem [#allocation10], %s449
        %p451 = pneg %p177
        %p452 = pneg %p174
        %s453 = sand.u32 %s190, 1
        %s454 = scalar_lea.sflag [#allocation12], %s453
        %s455 = sand.u32 %s190, 1
        %s456 = smul.addr %s455, 5
        %s457 = scalar_lea.vmem [#allocation11], %s456
        %p458 = pneg %p203
        %p459 = pneg %p200
        %p460 = pneg %p229
        %p461 = pneg %p226
        %s462 = sand.u32 %s216, 1
        %s463 = scalar_lea.sflag [#allocation4], %s462
        %s464 = sand.u32 %s216, 1
        %s465 = smul.addr %s464, 40
        %s466 = scalar_lea.vmem [#allocation13], %s465
        %p467 = scmp.lt.s32.totalorder %s31, 4
        %s468 = scalar_select %p467, %s31, 4
        %s469 = scalar_lea.vmem %s4, %s468
        %v471 = vld [vmem:[#allocation2] sm:$0xff]
        %v472 = vld [vmem:[%s379] sm:$0xf]
        %v473 = vld [vmem:[%s379 + $0x4] sm:$0xf]
        %v474 = vld [vmem:[%s379 + $0x8] sm:$0xf]
        %v475 = vld [vmem:[%s379 + $0xc] sm:$0xf]
        %v476 = vld [vmem:[%s379 + $0x10] sm:$0xf]
        %v477 = vld [vmem:[%s379 + $0x14] sm:$0xf]
        %v478 = vld [vmem:[%s379 + $0x18] sm:$0xf]
        %v479 = vld [vmem:[%s379 + $0x1c] sm:$0xf]
        %v480 = vld [vmem:[%s379 + $0x20] sm:$0xf]
        %v481 = vld [vmem:[%s379 + $0x24] sm:$0xf]
        %v482 = vld [vmem:[%s379 + $0x28] sm:$0xf]
        %v483 = vld [vmem:[%s379 + $0x2c] sm:$0xf]
        %v484 = vld [vmem:[%s379 + $0x30] sm:$0xf]
        %v485 = vld [vmem:[%s379 + $0x34] sm:$0xf]
        %v486 = vld [vmem:[%s379 + $0x38] sm:$0xf]
        %v487 = vld [vmem:[%s379 + $0x3c] sm:$0xf]
        %v488 = vld [vmem:[%s379 + $0x40] sm:$0xf]
        %v489 = vld [vmem:[%s379 + $0x44] sm:$0xf]
        %v490 = vld [vmem:[%s379 + $0x48] sm:$0xf]
        %v491 = vld [vmem:[%s379 + $0x4c] sm:$0xf]
        %v492 = vld [vmem:[%s379 + $0x50] sm:$0xf]
        %v493 = vld [vmem:[%s379 + $0x54] sm:$0xf]
        %v494 = vld [vmem:[%s379 + $0x58] sm:$0xf]
        %v495 = vld [vmem:[%s379 + $0x5c] sm:$0xf]
        %v496 = vld [vmem:[%s379 + $0x60] sm:$0xf]
        %v497 = vld [vmem:[%s379 + $0x64] sm:$0xf]
        %v498 = vld [vmem:[%s379 + $0x68] sm:$0xf]
        %v499 = vld [vmem:[%s379 + $0x6c] sm:$0xf]
        %v500 = vld [vmem:[%s379 + $0x70] sm:$0xf]
        %v501 = vld [vmem:[%s379 + $0x74] sm:$0xf]
        %v502 = vld [vmem:[%s379 + $0x78] sm:$0xf]
        %v503 = vld [vmem:[%s379 + $0x7c] sm:$0xf]
        %v504 = vld [vmem:[%s387] sm:$0x1]
        %v506 = vlaneseq
        %v507 = vshrl.u32 %v506, 7
        %v508 = vsub.s32 0, %v507
        %v509 = vrot.slane %v504, %v508
        %v512 = vunpack.c.l.b16 %v471
        %v513 = vunpack.c.h.b16 %v471
        %v514 = vpack.c.b16 %v512, %v512
        %v515 = vpack.c.b16 %v513, %v513
        %v550 = vunpack.c.l.b16 %v472
        %v551 = vunpack.c.l.b16 %v473
        %v552 = vunpack.c.l.b16 %v474
        %v553 = vunpack.c.l.b16 %v475
        %v554 = vunpack.c.l.b16 %v476
        %v555 = vunpack.c.l.b16 %v477
        %v556 = vunpack.c.l.b16 %v478
        %v557 = vunpack.c.l.b16 %v479
        %v558 = vunpack.c.l.b16 %v480
        %v559 = vunpack.c.l.b16 %v481
        %v560 = vunpack.c.l.b16 %v482
        %v561 = vunpack.c.l.b16 %v483
        %v562 = vunpack.c.l.b16 %v484
        %v563 = vunpack.c.l.b16 %v485
        %v564 = vunpack.c.l.b16 %v486
        %v565 = vunpack.c.l.b16 %v487
        %v566 = vunpack.c.l.b16 %v488
        %v567 = vunpack.c.l.b16 %v489
        %v568 = vunpack.c.l.b16 %v490
        %v569 = vunpack.c.l.b16 %v491
        %v570 = vunpack.c.l.b16 %v492
        %v571 = vunpack.c.l.b16 %v493
        %v572 = vunpack.c.l.b16 %v494
        %v573 = vunpack.c.l.b16 %v495
        %v574 = vunpack.c.l.b16 %v496
        %v575 = vunpack.c.l.b16 %v497
        %v576 = vunpack.c.l.b16 %v498
        %v577 = vunpack.c.l.b16 %v499
        %v578 = vunpack.c.l.b16 %v500
        %v579 = vunpack.c.l.b16 %v501
        %v580 = vunpack.c.l.b16 %v502
        %v581 = vunpack.c.l.b16 %v503
        %v582 = vpack.c.b16 %v551, %v550
        %v583 = vpack.c.b16 %v553, %v552
        %v584 = vpack.c.b16 %v555, %v554
        %v585 = vpack.c.b16 %v557, %v556
        %v586 = vpack.c.b16 %v559, %v558
        %v587 = vpack.c.b16 %v561, %v560
        %v588 = vpack.c.b16 %v563, %v562
        %v589 = vpack.c.b16 %v565, %v564
        %v590 = vpack.c.b16 %v567, %v566
        %v591 = vpack.c.b16 %v569, %v568
        %v592 = vpack.c.b16 %v571, %v570
        %v593 = vpack.c.b16 %v573, %v572
        %v594 = vpack.c.b16 %v575, %v574
        %v595 = vpack.c.b16 %v577, %v576
        %v596 = vpack.c.b16 %v579, %v578
        %v597 = vpack.c.b16 %v581, %v580
        %614 = vmatprep.subr.bf16.mxu0 0
        %615 = vmatpush1.bf16.msra.mxu0 %v589
        %616 = vmatprep.subr.bf16.mxu0 0
        %617 = vmatpush1.bf16.msra.mxu0 %v588
        %618 = vmatprep.subr.bf16.mxu0 0
        %619 = vmatpush1.bf16.msra.mxu0 %v587
        %620 = vmatprep.subr.bf16.mxu0 0
        %621 = vmatpush1.bf16.msra.mxu0 %v586
        %622 = vmatprep.subr.bf16.mxu0 0
        %623 = vmatpush1.bf16.msra.mxu0 %v585
        %624 = vmatprep.subr.bf16.mxu0 0
        %625 = vmatpush1.bf16.msra.mxu0 %v584
        %626 = vmatprep.subr.bf16.mxu0 0
        %627 = vmatpush1.bf16.msra.mxu0 %v583
        %628 = vmatprep.subr.bf16.mxu0 0
        %629 = vmatpush1.bf16.msra.mxu0 %v582
        %630 = vmatprep.subr.bf16.mxu0 0
        %631 = vmatpush2.bf16.msra.mxu0 %v597
        %632 = vmatprep.subr.bf16.mxu0 0
        %633 = vmatpush2.bf16.msra.mxu0 %v596
        %634 = vmatprep.subr.bf16.mxu0 0
        %635 = vmatpush2.bf16.msra.mxu0 %v595
        %636 = vmatprep.subr.bf16.mxu0 0
        %637 = vmatpush2.bf16.msra.mxu0 %v594
        %638 = vmatprep.subr.bf16.mxu0 0
        %639 = vmatpush2.bf16.msra.mxu0 %v593
        %640 = vmatprep.subr.bf16.mxu0 0
        %641 = vmatpush2.bf16.msra.mxu0 %v592
        %642 = vmatprep.subr.bf16.mxu0 0
        %643 = vmatpush2.bf16.msra.mxu0 %v591
        %644 = vmatprep.subr.bf16.mxu0 0
        %645 = vmatpush2.bf16.msra.mxu0 %v590
        %646 = vmatprep.mubr.bf16.mxu0 %v515
        %647 = vmatmul.mubr.bf16.gmra.mxu0 %v514
        %v648 = vpop.f32.mrf.mxu0
        %v649 = vadd.f32 %v509, %v648
        %v650 = vpop.f32.mrf.mxu0
        %v651 = vpop.f32.mrf.mxu0
        %v652 = vpop.f32.mrf.mxu0
        %653 = vdwg.mxu0
        %v654 = vmax.f32 %v649, 0.0
        %v655 = vpack.c.bf16 %v654, %v654
        %v656 = vld [vmem:[%s396] sm:$0xf]
        %v657 = vld [vmem:[%s396 + $0x4] sm:$0xf]
        %v658 = vld [vmem:[%s396 + $0x8] sm:$0xf]
        %v659 = vld [vmem:[%s396 + $0xc] sm:$0xf]
        %v660 = vld [vmem:[%s396 + $0x10] sm:$0xf]
        %v661 = vld [vmem:[%s396 + $0x14] sm:$0xf]
        %v662 = vld [vmem:[%s396 + $0x18] sm:$0xf]
        %v663 = vld [vmem:[%s396 + $0x1c] sm:$0xf]
        %v664 = vld [vmem:[%s396 + $0x20] sm:$0xf]
        %v665 = vld [vmem:[%s396 + $0x24] sm:$0xf]
        %v666 = vld [vmem:[%s396 + $0x28] sm:$0xf]
        %v667 = vld [vmem:[%s396 + $0x2c] sm:$0xf]
        %v668 = vld [vmem:[%s396 + $0x30] sm:$0xf]
        %v669 = vld [vmem:[%s396 + $0x34] sm:$0xf]
        %v670 = vld [vmem:[%s396 + $0x38] sm:$0xf]
        %v671 = vld [vmem:[%s396 + $0x3c] sm:$0xf]
        %v672 = vld [vmem:[%s469] sm:$0x1]
        %v674 = vlaneseq
        %v675 = vshrl.u32 %v674, 7
        %v676 = vsub.s32 0, %v675
        %v677 = vrot.slane %v672, %v676
        %v695 = vunpack.c.l.b16 %v656
        %v696 = vunpack.c.l.b16 %v657
        %v697 = vunpack.c.l.b16 %v658
        %v698 = vunpack.c.l.b16 %v659
        %v699 = vunpack.c.l.b16 %v660
        %v700 = vunpack.c.l.b16 %v661
        %v701 = vunpack.c.l.b16 %v662
        %v702 = vunpack.c.l.b16 %v663
        %v703 = vunpack.c.l.b16 %v664
        %v704 = vunpack.c.l.b16 %v665
        %v705 = vunpack.c.l.b16 %v666
        %v706 = vunpack.c.l.b16 %v667
        %v707 = vunpack.c.l.b16 %v668
        %v708 = vunpack.c.l.b16 %v669
        %v709 = vunpack.c.l.b16 %v670
        %v710 = vunpack.c.l.b16 %v671
        %v711 = vpack.c.b16 %v696, %v695
        %v712 = vpack.c.b16 %v698, %v697
        %v713 = vpack.c.b16 %v700, %v699
        %v714 = vpack.c.b16 %v702, %v701
        %v715 = vpack.c.b16 %v704, %v703
        %v716 = vpack.c.b16 %v706, %v705
        %v717 = vpack.c.b16 %v708, %v707
        %v718 = vpack.c.b16 %v710, %v709
        %727 = vmatprep.subr.bf16.mxu0 0
        %728 = vmatpush1.bf16.msra.mxu0 %v718
        %729 = vmatprep.subr.bf16.mxu0 0
        %730 = vmatpush1.bf16.msra.mxu0 %v717
        %731 = vmatprep.subr.bf16.mxu0 0
        %732 = vmatpush1.bf16.msra.mxu0 %v716
        %733 = vmatprep.subr.bf16.mxu0 0
        %734 = vmatpush1.bf16.msra.mxu0 %v715
        %735 = vmatprep.subr.bf16.mxu0 0
        %736 = vmatpush1.bf16.msra.mxu0 %v714
        %737 = vmatprep.subr.bf16.mxu0 0
        %738 = vmatpush1.bf16.msra.mxu0 %v713
        %739 = vmatprep.subr.bf16.mxu0 0
        %740 = vmatpush1.bf16.msra.mxu0 %v712
        %741 = vmatprep.subr.bf16.mxu0 0
        %742 = vmatpush1.bf16.msra.mxu0 %v711
        %743 = vmatprep.subr.bf16.mxu0 0
        %744 = vmatpush2.bf16.msra.mxu0 0
        %745 = vmatprep.subr.bf16.mxu0 0
        %746 = vmatpush2.bf16.msra.mxu0 0
        %747 = vmatprep.subr.bf16.mxu0 0
        %748 = vmatpush2.bf16.msra.mxu0 0
        %749 = vmatprep.subr.bf16.mxu0 0
        %750 = vmatpush2.bf16.msra.mxu0 0
        %751 = vmatprep.subr.bf16.mxu0 0
        %752 = vmatpush2.bf16.msra.mxu0 0
        %753 = vmatprep.subr.bf16.mxu0 0
        %754 = vmatpush2.bf16.msra.mxu0 0
        %755 = vmatprep.subr.bf16.mxu0 0
        %756 = vmatpush2.bf16.msra.mxu0 0
        %757 = vmatprep.subr.bf16.mxu0 0
        %758 = vmatpush2.bf16.msra.mxu0 0
        %759 = vmatprep.mubr.bf16.mxu0 0
        %760 = vmatmul.mubr.bf16.gmra.mxu0 %v655
        %v761 = vpop.f32.mrf.mxu0
        %v762 = vadd.f32 %v677, %v761
        %v763 = vpop.f32.mrf.mxu0
        %v764 = vpop.f32.mrf.mxu0
        %v765 = vpop.f32.mrf.mxu0
        %766 = vdwg.mxu0
        %v767 = vmax.f32 %v762, 0.0
        %v768 = vpack.c.bf16 %v767, %v767
        %v769 = vld [vmem:[%s405] sm:$0xff]
        %v770 = vld [vmem:[%s405 + $0x8] sm:$0xff]
        %v771 = vld [vmem:[%s405 + $0x10] sm:$0xf]
        %v772 = vld [vmem:[%s405 + $0x14] sm:$0xff]
        %v773 = vld [vmem:[%s405 + $0x1c] sm:$0xff]
        %v774 = vld [vmem:[%s405 + $0x24] sm:$0xf]
        %v775 = vld [vmem:[%s405 + $0x28] sm:$0xff]
        %v776 = vld [vmem:[%s405 + $0x30] sm:$0xff]
        %v777 = vld [vmem:[%s405 + $0x38] sm:$0xf]
        %v778 = vld [vmem:[%s405 + $0x3c] sm:$0xff]
        %v779 = vld [vmem:[%s405 + $0x44] sm:$0xff]
        %v780 = vld [vmem:[%s405 + $0x4c] sm:$0xf]
        %v781 = vld [vmem:[%s405 + $0x50] sm:$0xff]
        %v782 = vld [vmem:[%s405 + $0x58] sm:$0xff]
        %v783 = vld [vmem:[%s405 + $0x60] sm:$0xf]
        %v784 = vld [vmem:[%s405 + $0x64] sm:$0xff]
        %v785 = vld [vmem:[%s405 + $0x6c] sm:$0xff]
        %v786 = vld [vmem:[%s405 + $0x74] sm:$0xf]
        %v787 = vld [vmem:[%s405 + $0x78] sm:$0xff]
        %v788 = vld [vmem:[%s405 + $0x80] sm:$0xff]
        %v789 = vld [vmem:[%s405 + $0x88] sm:$0xf]
        %v790 = vld [vmem:[%s405 + $0x8c] sm:$0xff]
        %v791 = vld [vmem:[%s405 + $0x94] sm:$0xff]
        %v792 = vld [vmem:[%s405 + $0x9c] sm:$0xf]
        %v793 = vld [vmem:[%s405 + $0xa0] sm:$0xff]
        %v794 = vld [vmem:[%s405 + $0xa8] sm:$0xff]
        %v795 = vld [vmem:[%s405 + $0xb0] sm:$0xf]
        %v796 = vld [vmem:[%s405 + $0xb4] sm:$0xff]
        %v797 = vld [vmem:[%s405 + $0xbc] sm:$0xff]
        %v798 = vld [vmem:[%s405 + $0xc4] sm:$0xf]
        %v799 = vld [vmem:[%s405 + $0xc8] sm:$0xff]
        %v800 = vld [vmem:[%s405 + $0xd0] sm:$0xff]
        %v801 = vld [vmem:[%s405 + $0xd8] sm:$0xf]
        %v802 = vld [vmem:[%s405 + $0xdc] sm:$0xff]
        %v803 = vld [vmem:[%s405 + $0xe4] sm:$0xff]
        %v804 = vld [vmem:[%s405 + $0xec] sm:$0xf]
        %v805 = vld [vmem:[%s405 + $0xf0] sm:$0xff]
        %v806 = vld [vmem:[%s405 + $0xf8] sm:$0xff]
        %v807 = vld [vmem:[%s405 + $0x100] sm:$0xf]
        %v808 = vld [vmem:[%s405 + $0x104] sm:$0xff]
        %v809 = vld [vmem:[%s405 + $0x10c] sm:$0xff]
        %v810 = vld [vmem:[%s405 + $0x114] sm:$0xf]
        %v811 = vld [vmem:[%s405 + $0x118] sm:$0xff]
        %v812 = vld [vmem:[%s405 + $0x120] sm:$0xff]
        %v813 = vld [vmem:[%s405 + $0x128] sm:$0xf]
        %v814 = vld [vmem:[%s405 + $0x12c] sm:$0xff]
        %v815 = vld [vmem:[%s405 + $0x134] sm:$0xff]
        %v816 = vld [vmem:[%s405 + $0x13c] sm:$0xf]
        %v817 = vld [vmem:[%s414] sm:$0x1f]
        %v819 = vlaneseq
        %v820 = vshrl.u32 %v819, 7
        %v821 = vsub.s32 0, %v820
        %v822 = vrot.slane %v817, %v821
        %v823 = vlaneseq
        %v824 = vshrl.u32 %v823, 7
        %v825 = vsub.s32 1, %v824
        %v826 = vrot.slane %v817, %v825
        %v827 = vlaneseq
        %v828 = vshrl.u32 %v827, 7
        %v829 = vsub.s32 2, %v828
        %v830 = vrot.slane %v817, %v829
        %v831 = vlaneseq
        %v832 = vshrl.u32 %v831, 7
        %v833 = vsub.s32 3, %v832
        %v834 = vrot.slane %v817, %v833
        %v835 = vlaneseq
        %v836 = vshrl.u32 %v835, 7
        %v837 = vsub.s32 4, %v836
        %v838 = vrot.slane %v817, %v837
        %v892 = vunpack.c.l.b16 %v769
        %v893 = vunpack.c.h.b16 %v769
        %v894 = vunpack.c.l.b16 %v770
        %v895 = vunpack.c.h.b16 %v770
        %v896 = vunpack.c.l.b16 %v771
        %v897 = vunpack.c.l.b16 %v772
        %v898 = vunpack.c.h.b16 %v772
        %v899 = vunpack.c.l.b16 %v773
        %v900 = vunpack.c.h.b16 %v773
        %v901 = vunpack.c.l.b16 %v774
        %v902 = vunpack.c.l.b16 %v775
        %v903 = vunpack.c.h.b16 %v775
        %v904 = vunpack.c.l.b16 %v776
        %v905 = vunpack.c.h.b16 %v776
        %v906 = vunpack.c.l.b16 %v777
        %v907 = vunpack.c.l.b16 %v778
        %v908 = vunpack.c.h.b16 %v778
        %v909 = vunpack.c.l.b16 %v779
        %v910 = vunpack.c.h.b16 %v779
        %v911 = vunpack.c.l.b16 %v780
        %v912 = vunpack.c.l.b16 %v781
        %v913 = vunpack.c.h.b16 %v781
        %v914 = vunpack.c.l.b16 %v782
        %v915 = vunpack.c.h.b16 %v782
        %v916 = vunpack.c.l.b16 %v783
        %v917 = vunpack.c.l.b16 %v784
        %v918 = vunpack.c.h.b16 %v784
        %v919 = vunpack.c.l.b16 %v785
        %v920 = vunpack.c.h.b16 %v785
        %v921 = vunpack.c.l.b16 %v786
        %v922 = vunpack.c.l.b16 %v787
        %v923 = vunpack.c.h.b16 %v787
        %v924 = vunpack.c.l.b16 %v788
        %v925 = vunpack.c.h.b16 %v788
        %v926 = vunpack.c.l.b16 %v789
        %v927 = vunpack.c.l.b16 %v790
        %v928 = vunpack.c.h.b16 %v790
        %v929 = vunpack.c.l.b16 %v791
        %v930 = vunpack.c.h.b16 %v791
        %v931 = vunpack.c.l.b16 %v792
        %v932 = vunpack.c.l.b16 %v793
        %v933 = vunpack.c.h.b16 %v793
        %v934 = vunpack.c.l.b16 %v794
        %v935 = vunpack.c.h.b16 %v794
        %v936 = vunpack.c.l.b16 %v795
        %v937 = vunpack.c.l.b16 %v796
        %v938 = vunpack.c.h.b16 %v796
        %v939 = vunpack.c.l.b16 %v797
        %v940 = vunpack.c.h.b16 %v797
        %v941 = vunpack.c.l.b16 %v798
        %v942 = vunpack.c.l.b16 %v799
        %v943 = vunpack.c.h.b16 %v799
        %v944 = vunpack.c.l.b16 %v800
        %v945 = vunpack.c.h.b16 %v800
        %v946 = vunpack.c.l.b16 %v801
        %v947 = vunpack.c.l.b16 %v802
        %v948 = vunpack.c.h.b16 %v802
        %v949 = vunpack.c.l.b16 %v803
        %v950 = vunpack.c.h.b16 %v803
        %v951 = vunpack.c.l.b16 %v804
        %v952 = vunpack.c.l.b16 %v805
        %v953 = vunpack.c.h.b16 %v805
        %v954 = vunpack.c.l.b16 %v806
        %v955 = vunpack.c.h.b16 %v806
        %v956 = vunpack.c.l.b16 %v807
        %v957 = vunpack.c.l.b16 %v808
        %v958 = vunpack.c.h.b16 %v808
        %v959 = vunpack.c.l.b16 %v809
        %v960 = vunpack.c.h.b16 %v809
        %v961 = vunpack.c.l.b16 %v810
        %v962 = vunpack.c.l.b16 %v811
        %v963 = vunpack.c.h.b16 %v811
        %v964 = vunpack.c.l.b16 %v812
        %v965 = vunpack.c.h.b16 %v812
        %v966 = vunpack.c.l.b16 %v813
        %v967 = vunpack.c.l.b16 %v814
        %v968 = vunpack.c.h.b16 %v814
        %v969 = vunpack.c.l.b16 %v815
        %v970 = vunpack.c.h.b16 %v815
        %v971 = vunpack.c.l.b16 %v816
        %v972 = vpack.c.b16 %v897, %v892
        %v973 = vpack.c.b16 %v898, %v893
        %v974 = vpack.c.b16 %v899, %v894
        %v975 = vpack.c.b16 %v900, %v895
        %v976 = vpack.c.b16 %v901, %v896
        %v977 = vpack.c.b16 %v907, %v902
        %v978 = vpack.c.b16 %v908, %v903
        %v979 = vpack.c.b16 %v909, %v904
        %v980 = vpack.c.b16 %v910, %v905
        %v981 = vpack.c.b16 %v911, %v906
        %v982 = vpack.c.b16 %v917, %v912
        %v983 = vpack.c.b16 %v918, %v913
        %v984 = vpack.c.b16 %v919, %v914
        %v985 = vpack.c.b16 %v920, %v915
        %v986 = vpack.c.b16 %v921, %v916
        %v987 = vpack.c.b16 %v927, %v922
        %v988 = vpack.c.b16 %v928, %v923
        %v989 = vpack.c.b16 %v929, %v924
        %v990 = vpack.c.b16 %v930, %v925
        %v991 = vpack.c.b16 %v931, %v926
        %v992 = vpack.c.b16 %v937, %v932
        %v993 = vpack.c.b16 %v938, %v933
        %v994 = vpack.c.b16 %v939, %v934
        %v995 = vpack.c.b16 %v940, %v935
        %v996 = vpack.c.b16 %v941, %v936
        %v997 = vpack.c.b16 %v947, %v942
        %v998 = vpack.c.b16 %v948, %v943
        %v999 = vpack.c.b16 %v949, %v944
        %v1000 = vpack.c.b16 %v950, %v945
        %v1001 = vpack.c.b16 %v951, %v946
        %v1002 = vpack.c.b16 %v957, %v952
        %v1003 = vpack.c.b16 %v958, %v953
        %v1004 = vpack.c.b16 %v959, %v954
        %v1005 = vpack.c.b16 %v960, %v955
        %v1006 = vpack.c.b16 %v961, %v956
        %v1007 = vpack.c.b16 %v967, %v962
        %v1008 = vpack.c.b16 %v968, %v963
        %v1009 = vpack.c.b16 %v969, %v964
        %v1010 = vpack.c.b16 %v970, %v965
        %v1011 = vpack.c.b16 %v971, %v966
        %1052 = vmatprep.subr.bf16.mxu0 %v1008
        %1053 = vmatpush1.bf16.msra.mxu0 %v1007
        %1054 = vmatprep.subr.bf16.mxu0 %v1003
        %1055 = vmatpush1.bf16.msra.mxu0 %v1002
        %1056 = vmatprep.subr.bf16.mxu0 %v998
        %1057 = vmatpush1.bf16.msra.mxu0 %v997
        %1058 = vmatprep.subr.bf16.mxu0 %v993
        %1059 = vmatpush1.bf16.msra.mxu0 %v992
        %1060 = vmatprep.subr.bf16.mxu0 %v988
        %1061 = vmatpush1.bf16.msra.mxu0 %v987
        %1062 = vmatprep.subr.bf16.mxu0 %v983
        %1063 = vmatpush1.bf16.msra.mxu0 %v982
        %1064 = vmatprep.subr.bf16.mxu0 %v978
        %1065 = vmatpush1.bf16.msra.mxu0 %v977
        %1066 = vmatprep.subr.bf16.mxu0 %v973
        %1067 = vmatpush1.bf16.msra.mxu0 %v972
        %1068 = vmatprep.subr.bf16.mxu0 0
        %1069 = vmatpush2.bf16.msra.mxu0 0
        %1070 = vmatprep.subr.bf16.mxu0 0
        %1071 = vmatpush2.bf16.msra.mxu0 0
        %1072 = vmatprep.subr.bf16.mxu0 0
        %1073 = vmatpush2.bf16.msra.mxu0 0
        %1074 = vmatprep.subr.bf16.mxu0 0
        %1075 = vmatpush2.bf16.msra.mxu0 0
        %1076 = vmatprep.subr.bf16.mxu0 0
        %1077 = vmatpush2.bf16.msra.mxu0 0
        %1078 = vmatprep.subr.bf16.mxu0 0
        %1079 = vmatpush2.bf16.msra.mxu0 0
        %1080 = vmatprep.subr.bf16.mxu0 0
        %1081 = vmatpush2.bf16.msra.mxu0 0
        %1082 = vmatprep.subr.bf16.mxu0 0
        %1083 = vmatpush2.bf16.msra.mxu0 0
        %1084 = vmatprep.mubr.bf16.mxu0 0
        %1085 = vmatmul.mubr.bf16.gmra.mxu0 %v768
        %v1086 = vpop.f32.mrf.mxu0
        %v1087 = vadd.f32 %v822, %v1086
        %v1088 = vpop.f32.mrf.mxu0
        %v1089 = vadd.f32 %v826, %v1088
        %v1090 = vpop.f32.mrf.mxu0
        %v1091 = vpop.f32.mrf.mxu0
        %1092 = vdwg.mxu0
        %1093 = vmatprep.subr.bf16.mxu0 %v1010
        %1094 = vmatpush1.bf16.msra.mxu0 %v1009
        %1095 = vmatprep.subr.bf16.mxu0 %v1005
        %1096 = vmatpush1.bf16.msra.mxu0 %v1004
        %1097 = vmatprep.subr.bf16.mxu0 %v1000
        %1098 = vmatpush1.bf16.msra.mxu0 %v999
        %1099 = vmatprep.subr.bf16.mxu0 %v995
        %1100 = vmatpush1.bf16.msra.mxu0 %v994
        %1101 = vmatprep.subr.bf16.mxu0 %v990
        %1102 = vmatpush1.bf16.msra.mxu0 %v989
        %1103 = vmatprep.subr.bf16.mxu0 %v985
        %1104 = vmatpush1.bf16.msra.mxu0 %v984
        %1105 = vmatprep.subr.bf16.mxu0 %v980
        %1106 = vmatpush1.bf16.msra.mxu0 %v979
        %1107 = vmatprep.subr.bf16.mxu0 %v975
        %1108 = vmatpush1.bf16.msra.mxu0 %v974
        %1109 = vmatprep.subr.bf16.mxu0 0
        %1110 = vmatpush2.bf16.msra.mxu0 0
        %1111 = vmatprep.subr.bf16.mxu0 0
        %1112 = vmatpush2.bf16.msra.mxu0 0
        %1113 = vmatprep.subr.bf16.mxu0 0
        %1114 = vmatpush2.bf16.msra.mxu0 0
        %1115 = vmatprep.subr.bf16.mxu0 0
        %1116 = vmatpush2.bf16.msra.mxu0 0
        %1117 = vmatprep.subr.bf16.mxu0 0
        %1118 = vmatpush2.bf16.msra.mxu0 0
        %1119 = vmatprep.subr.bf16.mxu0 0
        %1120 = vmatpush2.bf16.msra.mxu0 0
        %1121 = vmatprep.subr.bf16.mxu0 0
        %1122 = vmatpush2.bf16.msra.mxu0 0
        %1123 = vmatprep.subr.bf16.mxu0 0
        %1124 = vmatpush2.bf16.msra.mxu0 0
        %1125 = vmatprep.mubr.bf16.mxu0 0
        %1126 = vmatmul.mubr.bf16.gmra.mxu0 %v768
        %v1127 = vpop.f32.mrf.mxu0
        %v1128 = vadd.f32 %v830, %v1127
        %v1129 = vpop.f32.mrf.mxu0
        %v1130 = vadd.f32 %v834, %v1129
        %v1131 = vpop.f32.mrf.mxu0
        %v1132 = vpop.f32.mrf.mxu0
        %1133 = vdwg.mxu0
        %1134 = vmatprep.subr.bf16.mxu0 0
        %1135 = vmatpush1.bf16.msra.mxu0 %v1011
        %1136 = vmatprep.subr.bf16.mxu0 0
        %1137 = vmatpush1.bf16.msra.mxu0 %v1006
        %1138 = vmatprep.subr.bf16.mxu0 0
        %1139 = vmatpush1.bf16.msra.mxu0 %v1001
        %1140 = vmatprep.subr.bf16.mxu0 0
        %1141 = vmatpush1.bf16.msra.mxu0 %v996
        %1142 = vmatprep.subr.bf16.mxu0 0
        %1143 = vmatpush1.bf16.msra.mxu0 %v991
        %1144 = vmatprep.subr.bf16.mxu0 0
        %1145 = vmatpush1.bf16.msra.mxu0 %v986
        %1146 = vmatprep.subr.bf16.mxu0 0
        %1147 = vmatpush1.bf16.msra.mxu0 %v981
        %1148 = vmatprep.subr.bf16.mxu0 0
        %1149 = vmatpush1.bf16.msra.mxu0 %v976
        %1150 = vmatprep.subr.bf16.mxu0 0
        %1151 = vmatpush2.bf16.msra.mxu0 0
        %1152 = vmatprep.subr.bf16.mxu0 0
        %1153 = vmatpush2.bf16.msra.mxu0 0
        %1154 = vmatprep.subr.bf16.mxu0 0
        %1155 = vmatpush2.bf16.msra.mxu0 0
        %1156 = vmatprep.subr.bf16.mxu0 0
        %1157 = vmatpush2.bf16.msra.mxu0 0
        %1158 = vmatprep.subr.bf16.mxu0 0
        %1159 = vmatpush2.bf16.msra.mxu0 0
        %1160 = vmatprep.subr.bf16.mxu0 0
        %1161 = vmatpush2.bf16.msra.mxu0 0
        %1162 = vmatprep.subr.bf16.mxu0 0
        %1163 = vmatpush2.bf16.msra.mxu0 0
        %1164 = vmatprep.subr.bf16.mxu0 0
        %1165 = vmatpush2.bf16.msra.mxu0 0
        %1166 = vmatprep.mubr.bf16.mxu0 0
        %1167 = vmatmul.mubr.bf16.gmra.mxu0 %v768
        %v1168 = vpop.f32.mrf.mxu0
        %v1169 = vadd.f32 %v838, %v1168
        %v1170 = vpop.f32.mrf.mxu0
        %v1171 = vpop.f32.mrf.mxu0
        %v1172 = vpop.f32.mrf.mxu0
        %1173 = vdwg.mxu0
        %1174 = vst [vmem:[%s466] sm:$0xff] %v1087
        %1175 = vst [vmem:[%s466 + $0x8] sm:$0xff] %v1089
        %1176 = vst [vmem:[%s466 + $0x10] sm:$0xff] %v1128
        %1177 = vst [vmem:[%s466 + $0x18] sm:$0xff] %v1130
        %1178 = vst [vmem:[%s466 + $0x20] sm:$0xff] %v1169
        %s1179 = sand.u32 %s216, 1
        %s1180 = scalar_lea.sflag [#allocation4], %s1179
        %s1181 = sand.u32 %s216, 1
        %s1182 = smul.addr %s1181, 40
        %s1183 = scalar_lea.vmem [#allocation13], %s1182
        // Predicated region
        $region73: #{tpu_custom_call.1} parent=47 // pred_check
          %p1184 = pneg %p226
        $region74: #{tpu_custom_call.1} parent=47 // pred_check_branch
          %1186 = sbr.rel (%p1184) target = $region76
        $region75: #{tpu_custom_call.1} parent=47 // pred_region
          %s1188 = ssub.s32 640, 640
          %1189 = vsyncadd %s1180, %s1188
          %s1190 = smul.addr %s31, 5
          %s1191 = smul.addr %s1190, 128
          %s1192 = scalar_lea.hbm %s7, %s1191
          %s1194 = sshll.u32 %s1183, 4
          %s1195 = int_to_ptr.vmem [resolvable:$true] %s1194
          %1197 = dma.vmem_to_hbm [thread:$0]  %s1195, 640, %s1192, %s1180
        $region76: #{tpu_custom_call.1} parent=47 // pred_fallthru
          _
      $region48: #{tpu_custom_call.1} parent=5 // pred_fallthru
        _
      %p1198 = scmp.le.s32.totalorder 2, %s26
      // Predicated region
      $region77: #{tpu_custom_call.1} parent=5 // pred_check
        %p1199 = pneg %p1198
      $region78: #{tpu_custom_call.1} parent=5 // pred_check_branch
        %1201 = sbr.rel (%p1199) target = $region80
      $region79: #{tpu_custom_call.1} parent=5 // pred_region
        %s1202 = ssub.s32 %s26, 2
        // Predicated region
        $region81: #{tpu_custom_call.1} parent=79 // pred_check
          %p1203 = pneg %p232
        $region82: #{tpu_custom_call.1} parent=79 // pred_check_branch
          %1205 = sbr.rel (%p1203) target = $region84
        $region83: #{tpu_custom_call.1} parent=79 // pred_region
          %s1206 = sand.u32 %s217, 1
          %s1207 = scalar_lea.sflag [#allocation4], %s1206
          %s1208 = sand.u32 %s217, 1
          %s1209 = smul.addr %s1208, 40
          %s1210 = scalar_lea.vmem [#allocation13], %s1209
          %1211 = dma.done %s1207, 640
        $region84: #{tpu_custom_call.1} parent=79 // pred_fallthru
          _
      $region80: #{tpu_custom_call.1} parent=5 // pred_fallthru
        _
    $region6: #{tpu_custom_call.1} parent=1 // loop_footer
      %s30 = sadd.s32 1, %s26
    $region7: #{tpu_custom_call.1} parent=1 // loop_footer_branch
      %25 = sbr.rel target = $region3
    $region8: #{tpu_custom_call.1} parent=1 // loop_exit
      _
    %1212 = vsyncpa [#allocation3], 1
    %s1213 = scalar_lea.sflag [#allocation3], 1
    %1214 = vsyncpa %s1213, 1
    %1215 = vsyncpa [#allocation6], 1
    %s1216 = scalar_lea.sflag [#allocation6], 1
    %1217 = vsyncpa %s1216, 1
    %1218 = vsyncpa [#allocation9], 1
    %s1219 = scalar_lea.sflag [#allocation9], 1
    %1220 = vsyncpa %s1219, 1
    %1221 = vsyncpa [#allocation12], 1
    %s1222 = scalar_lea.sflag [#allocation12], 1
    %1223 = vsyncpa %s1222, 1
    %1224 = vsyncpa [#allocation4], 1
    %s1225 = scalar_lea.sflag [#allocation4], 1
    %1226 = vsyncpa %s1225, 1

</llo_original>
